<compile_context>
chip_gen: v5e
topology: v5e:2x2
jax: 0.10.0
libtpu: 0.0.40
codegen_flags: <defaults>
</compile_context>

<pallas_src>
import functools

import jax
import jax.numpy as jnp
from jax import lax
from jax.experimental import pallas as pl
from jax.experimental.pallas import tpu as pltpu


def _gram_kernel(f_ref, g_ref, *, tk, nk_per, kdim, needs_mask):
    """Accumulate a partial (un-normalized) gram matrix f @ f.T over K tiles."""
    k = pl.program_id(1)

    @pl.when(k == 0)
    def _():
        g_ref[...] = jnp.zeros_like(g_ref)

    f = f_ref[...]                       # native dtype feeds the MXU directly
    if needs_mask:
        # Zero the lanes past the true K extent: covers the overhanging edge
        # tile and any fully-redundant tile introduced by the per-core split.
        c = pl.program_id(0)
        tile = c * nk_per + k            # unclamped logical K-tile id
        col = tile * tk + lax.broadcasted_iota(jnp.int32, f.shape, 1)
        f = jnp.where(col < kdim, f, jnp.zeros_like(f))

    # f @ f.T without materializing a transpose: contract dim 1 of both
    # operands -> MXU transposed-operand path (no XLU vxpose of the tile).
    g_ref[...] += lax.dot_general(
        f, f,
        dimension_numbers=(((1,), (1,)), ((), ())),
        preferred_element_type=jnp.float32)


def _vmem_capacity_bytes():
    """Generation-aware VMEM capacity (v5e/v6e: 128 MiB, v7x: 64 MiB/TC)."""
    try:
        cap = getattr(pltpu.get_tpu_info(), "vmem_capacity_bytes", None)
        if cap:
            return int(cap)
    except Exception:
        pass
    return 64 << 20        # conservative fallback: v7x per-TensorCore VMEM


def _plan_tiles(m, kdim, feat_itemsize, vmem_cap):
    """Pick the K tile: a multiple of 128, sized so the working set fits in
    ~3/8 of VMEM, and small enough that the K loop has several steps so the
    auto-pipeline can overlap DMAs with compute."""
    k128 = pl.cdiv(kdim, 128) * 128
    budget = max(int(vmem_cap) * 3 // 8, 4 << 20)
    fixed = 2 * m * m * 4                 # double-buffered f32 gram output block
    per_col = 2 * m * feat_itemsize       # double-buffered feature tile, per lane
    avail = max(budget - fixed, 128 * per_col)
    tk_max = max(128, (avail // per_col) // 128 * 128)
    tk_max = min(tk_max, 32 * 1024)       # a few K lanes already saturates HBM
    # Prefer >= 4 K tiles (>= 2 per core half) for pipeline overlap.
    if k128 >= 4 * 128:
        tk_max = min(tk_max, max(128, (k128 // (4 * 128)) * 128))
    elif k128 >= 2 * 128:
        tk_max = min(tk_max, max(128, (k128 // (2 * 128)) * 128))
    nk = pl.cdiv(k128, tk_max)
    tk = pl.cdiv(k128 // 128, nk) * 128   # even out the tile sizes
    nk_total = pl.cdiv(kdim, tk)
    total_vmem = fixed + per_col * tk
    return tk, nk_total, total_vmem


def loss_marker_forward(x, target_gram, *, cast_features_to_bf16=False):
    """Pallas implementation of LossMarker.forward.

    Args:
      x: NCHW activation tensor, shape (N, C, H, W).
      target_gram: target gram matrix, shape (N*C, N*C).
      cast_features_to_bf16: opt-in bandwidth optimization (f32 accumulate).
    Returns:
      (layer_input, loss) -- layer_input unchanged (identity), loss a float32
      scalar (the value the module stores in self.loss).
    """
    n, c, h, w = x.shape
    m = n * c
    kdim = h * w
    inv_denom = 1.0 / float(n * c * h * w)

    # Metadata-only reshape; no wrapper-side padding copies of the activation.
    features = x.reshape(m, kdim)
    if cast_features_to_bf16 and features.dtype == jnp.float32:
        features = features.astype(jnp.bfloat16)
    feat_itemsize = jnp.dtype(features.dtype).itemsize

    vmem_cap = _vmem_capacity_bytes()
    tk, nk_total, total_vmem = _plan_tiles(m, kdim, feat_itemsize, vmem_cap)

    # Leading 'parallel' axis splits the K reduction into per-core halves so
    # both v7x TensorCores are engaged; each half produces a partial gram.
    num_splits = 2 if nk_total >= 2 else 1
    nk_per = pl.cdiv(nk_total, num_splits)
    needs_mask = (num_splits * nk_per * tk != kdim)
    needs_clamp = (num_splits * nk_per > nk_total)

    def feat_map(ci, ki):
        tile = ci * nk_per + ki
        if needs_clamp:
            # Redundant trailing tile of the second half: re-read the last
            # valid tile (cheap) and mask it to zero in-kernel.
            tile = jnp.minimum(tile, nk_total - 1)
        return (0, tile)

    kernel = functools.partial(_gram_kernel, tk=tk, nk_per=nk_per,
                               kdim=kdim, needs_mask=needs_mask)

    vmem_limit = int(min(max(total_vmem + (8 << 20), 16 << 20),
                         vmem_cap * 3 // 4))

    # TODO(synk): for large M (>= ~1024) add a gram-row-block grid axis
    #             (tm, M) so the resident gram block stops scaling as M^2 in
    #             VMEM (required for M where M^2 f32 overruns the VMEM limit).
    partials = pl.pallas_call(
        kernel,
        out_shape=jax.ShapeDtypeStruct((num_splits, m, m), jnp.float32),
        grid_spec=pltpu.PrefetchScalarGridSpec(
            num_scalar_prefetch=0,
            grid=(num_splits, nk_per),
            in_specs=[pl.BlockSpec((m, tk), feat_map)],
            out_specs=pl.BlockSpec((None, m, m), lambda ci, ki: (ci, 0, 0)),
        ),
        compiler_params=pltpu.CompilerParams(
            dimension_semantics=("parallel", "arbitrary"),
            vmem_limit_bytes=vmem_limit),
        cost_estimate=pl.CostEstimate(
            flops=2 * m * m * kdim,
            transcendentals=0,
            bytes_accessed=m * kdim * feat_itemsize + num_splits * m * m * 4),
    )(features)

    # Tiny (M, M) epilogue left to XLA (fuses to one cheap op); keeping it out
    # of the kernel is what lets the K reduction split across cores w/o sync.
    gram = jnp.sum(partials, axis=0) * inv_denom
    diff = gram - target_gram.astype(jnp.float32)
    loss = jnp.mean(diff * diff)
    return x, loss


def _gram_reference(x):
    n, c, h, w = x.shape
    f = x.reshape(n * c, h * w).astype(jnp.float32)
    g = jnp.dot(f, f.T, precision=lax.Precision.HIGHEST)
    return g / float(n * c * h * w)


def _check(key, shape):
    k_x, k_ref = jax.random.split(key)
    x = jax.random.normal(k_x, shape, dtype=jnp.float32)
    # Deterministic "stored" target gram, synthesized from a reference tensor.
    ref_act = jax.random.normal(k_ref, shape, dtype=jnp.float32)
    target_gram = _gram_reference(ref_act)

    out, loss = loss_marker_forward(x, target_gram)
    out = jax.block_until_ready(out)
    loss = jax.block_until_ready(loss)

    g_ref = _gram_reference(x)
    loss_ref = jnp.mean((g_ref - target_gram) ** 2)

    assert out.shape == x.shape and jnp.allclose(out, x), "identity output mismatch"
    assert jnp.allclose(loss, loss_ref, rtol=2e-4, atol=1e-6), (shape, loss, loss_ref)


if __name__ == "__main__":
    key = jax.random.PRNGKey(0)
    k0, k1, k2 = jax.random.split(key, 3)

    # Small NCHW shapes consistent with the module.
    _check(k0, (2, 4, 16, 16))   # K=256: exact K tiles, 2-way core split
    _check(k1, (2, 3, 14, 14))   # K=196: masked edge tile, M not multiple of 8
    _check(k2, (2, 4, 15, 20))   # K=300: odd tile count -> clamped redundant tile

    print("KERNEL_OK")
</pallas_src>

<mosaic_0001>
module attributes {stable_mosaic.version = 11 : i64} {
  func.func @_gram_kernel(%arg0: i32, %arg1: i32, %arg2: memref<8x128xf32, #tpu.memory_space<vmem>>, %arg3: memref<1x8x8xf32, #tpu.memory_space<vmem>>) attributes {dimension_semantics = [#tpu.dimension_semantics<parallel>, #tpu.dimension_semantics<arbitrary>], iteration_bounds = array<i64: 2, 1>, scalar_prefetch = 0 : i64, scratch_operands = 0 : i64, tpu.core_type = #tpu.core_type<tc>, window_params = [{transform_indices = @transform_0, window_bounds = array<i64: 8, 128>}, {transform_indices = @transform_1, window_bounds = array<i64: 1, 8, 8>}]} {
    %c0_i32 = arith.constant 0 : i32
    %0 = arith.cmpi eq, %arg1, %c0_i32 : i32
    %1 = arith.extui %0 : i1 to i32
    %c0_i32_0 = arith.constant 0 : i32
    %2 = arith.cmpi ne, %1, %c0_i32_0 : i32
    scf.if %2 {
      %cst_8 = arith.constant 0.000000e+00 : f32
      %11 = vector.broadcast %cst_8 : f32 to vector<8x8xf32>
      %c0_9 = arith.constant 0 : index
      %c0_10 = arith.constant 0 : index
      %c0_11 = arith.constant 0 : index
      %12 = vector.load %arg3[%c0_9, %c0_10, %c0_11] : memref<1x8x8xf32, #tpu.memory_space<vmem>>, vector<1x8x8xf32>
      %13 = vector.shape_cast %12 : vector<1x8x8xf32> to vector<8x8xf32>
      %14 = vector.shape_cast %11 : vector<8x8xf32> to vector<1x8x8xf32>
      tpu.vector_store %arg3[%c0_9, %c0_10, %c0_11], %14 {strides = array<i32>} : memref<1x8x8xf32, #tpu.memory_space<vmem>>, vector<1x8x8xf32>,
    } else {
    }
    %c0 = arith.constant 0 : index
    %c0_1 = arith.constant 0 : index
    %3 = vector.load %arg2[%c0, %c0_1] : memref<8x128xf32, #tpu.memory_space<vmem>>, vector<8x128xf32>
    %c0_2 = arith.constant 0 : index
    %c0_3 = arith.constant 0 : index
    %c0_4 = arith.constant 0 : index
    %4 = vector.load %arg3[%c0_2, %c0_3, %c0_4] : memref<1x8x8xf32, #tpu.memory_space<vmem>>, vector<1x8x8xf32>
    %5 = vector.shape_cast %4 : vector<1x8x8xf32> to vector<8x8xf32>
    %cst = arith.constant dense<0.000000e+00> : vector<8x8xf32>
    %6 = tpu.matmul %3, %3, %cst {dimension_numbers = #tpu.dot_dimension_numbers<[1], [1], [0], [0], [0, 0, 1, 0], [], []>} : vector<8x128xf32>, vector<8x128xf32>, vector<8x8xf32> -> vector<8x8xf32>
    %7 = arith.addf %5, %6 : vector<8x8xf32>
    %c0_5 = arith.constant 0 : index
    %c0_6 = arith.constant 0 : index
    %c0_7 = arith.constant 0 : index
    %8 = vector.load %arg3[%c0_5, %c0_6, %c0_7] : memref<1x8x8xf32, #tpu.memory_space<vmem>>, vector<1x8x8xf32>
    %9 = vector.shape_cast %8 : vector<1x8x8xf32> to vector<8x8xf32>
    %10 = vector.shape_cast %7 : vector<8x8xf32> to vector<1x8x8xf32>
    tpu.vector_store %arg3[%c0_5, %c0_6, %c0_7], %10 {strides = array<i32>} : memref<1x8x8xf32, #tpu.memory_space<vmem>>, vector<1x8x8xf32>,
    return
  }
  func.func @transform_0(%arg0: i32, %arg1: i32) -> (i32, i32) {
    %c1_i32 = arith.constant 1 : i32
    %0 = arith.muli %arg0, %c1_i32 : i32
    %1 = arith.addi %0, %arg1 : i32
    %c0_i32 = arith.constant 0 : i32
    %c0_i32_0 = arith.constant 0 : i32
    return %c0_i32, %1 : i32, i32
  }
  func.func @transform_1(%arg0: i32, %arg1: i32) -> (i32, i32, i32) {
    %c0_i32 = arith.constant 0 : i32
    %c0_i32_0 = arith.constant 0 : i32
    %c0_i32_1 = arith.constant 0 : i32
    return %arg0, %c0_i32, %c0_i32_0 : i32, i32, i32
  }
}

</mosaic_0001>

<llo_original>
// kernel: tpu_custom_call.1
$region0: #{tpu_custom_call.1}
  #allocation0 [shape = 'u32[]', space=smem, size = 0x4, offset = 0x4, fixed_abs, tag = 'smem constant byte address 0x4 - core index']
  #allocation1 [shape = 'u32[72,128]{1,0:T(1,128)}', space=vmem, size = 0x9000, scoped, tag = 'internal scratch']
  %s0 = inlined_call_operand.hbm [shape: f32[8,256], index: 0, kind: input, shape index: {}]
  %s1 = inlined_call_operand.hbm [shape: f32[2,8,8], index: 1, kind: output, shape index: {}]
  %s2 = sld [smem:[#allocation0]]
  $region45: #{tpu_custom_call.1} parent=0
    _
  %s4 = ssub.s32 1, %s2
  %s5 = scalar_select 0, %s4, %s2
  $region1: #{tpu_custom_call.1} parent=0
    #allocation2 [shape = 'u8[8192]{0}', space=vmem, size = 0x2000, scoped, tag = 'input window, operand 0']
    #allocation3 [shape = 's32[2]{0}', space=sflag, size = 0x8, scoped, tag = 'scoped memory for tpu_custom_call.1']
    #allocation4 [shape = 's32[2]{0}', space=sflag, size = 0x8, scoped, tag = 'scoped memory for tpu_custom_call.1']
    #allocation5 [shape = 'u8[8192]{0}', space=vmem, size = 0x2000, scoped, tag = 'output window, operand 0']
    %6 = vsyncpa [#allocation3], 0
    %s7 = scalar_lea.sflag [#allocation3], 1
    %8 = vsyncpa %s7, 0
    %9 = vsyncpa [#allocation4], 0
    %s10 = scalar_lea.sflag [#allocation4], 1
    %11 = vsyncpa %s10, 0
    loop: start=0, step=1, limit=4
    $region2: #{tpu_custom_call.1} parent=1 // loop_pre_header
      _
    $region3: #{tpu_custom_call.1} parent=1 // loop_header
      %s13 = sphi 0, %s17
      %p14 = scmp.ge.s32.totalorder %s13, 4
      %s20 = sphi 0, %s32
      %s21 = sphi 0, %s28
      %s22 = sphi 0, %s20
      %s23 = sphi 0, %s21
      %s24 = sphi 0, %s22
      %s25 = sphi 0, %s23
      %s37 = sphi 0, %s39
      %s40 = sphi 0, %s37
      %s41 = sphi 0, %s40
      %s57 = sphi 0, %s41
      %s63 = sphi 0, %s65
      %s66 = sphi 0, %s63
      %s67 = sphi 0, %s66
      %s83 = sphi 0, %s67
    $region4: #{tpu_custom_call.1} parent=1 // loop_header_branch
      %16 = sbr.rel (%p14) target = $region8
    $region5: #{tpu_custom_call.1} parent=1 // loop_body
      %s18 = ssub.s32 %s13, 1
      %s19 = ssub.s32 %s13, 2
      %s26 = sadd.s32 1, %s21
      %p27 = scmp.ge.s32.totalorder %s26, 1
      %s28 = scalar_select %p27, 0, %s26
      %s29 = sadd.s32 1, %s20
      %s30 = scalar_select %p27, %s29, %s20
      %p31 = scmp.ge.s32.totalorder %s30, 2
      %s32 = scalar_select %p31, 0, %s30
      %s33 = sadd.s32 %s20, %s21
      %s34 = sadd.s32 %s32, %s28
      %s35 = ssub.s32 %s33, %s34
      %p36 = scmp.eq.s32.totalorder %s35, 0
      %s38 = sadd.s32 %s37, 1
      %s39 = scalar_select %p36, %s37, %s38
      %p42 = pneg %p36
      %p43 = scmp.eq.s32.totalorder %s13, 1
      %p44 = por %p42, %p43
      %p45 = scmp.ne.s32.totalorder %s37, %s40
      %p46 = scmp.eq.s32.totalorder %s13, 0
      %p47 = por %p45, %p46
      %p48 = scmp.ne.s32.totalorder %s37, %s40
      %p49 = scmp.eq.s32.totalorder %s18, 1
      %p50 = por %p48, %p49
      %p51 = scmp.ne.s32.totalorder %s40, %s41
      %p52 = scmp.eq.s32.totalorder %s18, 0
      %p53 = por %p51, %p52
      %p54 = scmp.ne.s32.totalorder %s40, %s41
      %p55 = scmp.eq.s32.totalorder %s19, 1
      %p56 = por %p54, %p55
      %p58 = scmp.ne.s32.totalorder %s41, %s57
      %p59 = scmp.eq.s32.totalorder %s19, 0
      %p60 = por %p58, %p59
      %s61 = ssub.s32 %s20, %s32
      %p62 = scmp.eq.s32.totalorder %s61, 0
      %s64 = sadd.s32 %s63, 1
      %s65 = scalar_select %p62, %s63, %s64
      %p68 = pneg %p62
      %p69 = scmp.eq.s32.totalorder %s13, 1
      %p70 = por %p68, %p69
      %p71 = scmp.ne.s32.totalorder %s63, %s66
      %p72 = scmp.eq.s32.totalorder %s13, 0
      %p73 = por %p71, %p72
      %p74 = scmp.ne.s32.totalorder %s63, %s66
      %p75 = scmp.eq.s32.totalorder %s18, 1
      %p76 = por %p74, %p75
      %p77 = scmp.ne.s32.totalorder %s66, %s67
      %p78 = scmp.eq.s32.totalorder %s18, 0
      %p79 = por %p77, %p78
      %p80 = scmp.ne.s32.totalorder %s66, %s67
      %p81 = scmp.eq.s32.totalorder %s19, 1
      %p82 = por %p80, %p81
      %p84 = scmp.ne.s32.totalorder %s67, %s83
      %p85 = scmp.eq.s32.totalorder %s19, 0
      %p86 = por %p84, %p85
      %p87 = scmp.le.s32.totalorder 1, %s13
      %p88 = scmp.lt.s32.totalorder %s13, 3
      %p89 = pnand %p87, %p88
      %p90 = pneg %p89
      // Predicated region
      $region9: #{tpu_custom_call.1} parent=5 // pred_check
        _
      $region10: #{tpu_custom_call.1} parent=5 // pred_check_branch
        %92 = sbr.rel (%p89) target = $region12
      $region11: #{tpu_custom_call.1} parent=5 // pred_region
        %s93 = ssub.s32 %s13, 1
      $region12: #{tpu_custom_call.1} parent=5 // pred_fallthru
        _
      %p94 = scmp.lt.s32.totalorder %s13, 2
      // Predicated region
      $region13: #{tpu_custom_call.1} parent=5 // pred_check
        %p95 = pneg %p94
      $region14: #{tpu_custom_call.1} parent=5 // pred_check_branch
        %97 = sbr.rel (%p95) target = $region16
      $region15: #{tpu_custom_call.1} parent=5 // pred_region
        // Predicated region
        $region17: #{tpu_custom_call.1} parent=15 // pred_check
          %p98 = pneg %p47
        $region18: #{tpu_custom_call.1} parent=15 // pred_check_branch
          %100 = sbr.rel (%p98) target = $region20
        $region19: #{tpu_custom_call.1} parent=15 // pred_region
          %s101 = sand.u32 %s37, 1
          %s102 = scalar_lea.sflag [#allocation3], %s101
          %s103 = sand.u32 %s37, 1
          %s104 = smul.addr %s103, 8
          %s105 = scalar_lea.vmem [#allocation2], %s104
          %s106 = sadd.s32 %s20, %s21
          %108 = vsyncadd %s102, 0
          %s109 = smul.addr %s106, 8
          %s110 = scalar_lea.hbm %s0, %s109
          %s112 = sshll.u32 %s110, 4
          %s113 = int_to_ptr.hbm [resolvable:$true] %s112
          %s114 = sshll.u32 %s105, 4
          %s115 = int_to_ptr.vmem [resolvable:$true] %s114
          %117 = dma.hbm_to_vmem [thread:$0]  %s113, 128, %s115, %s102
        $region20: #{tpu_custom_call.1} parent=15 // pred_fallthru
          _
      $region16: #{tpu_custom_call.1} parent=5 // pred_fallthru
        _
      %p118 = scmp.le.s32.totalorder 1, %s13
      %p119 = scmp.lt.s32.totalorder %s13, 3
      %p120 = pnand %p118, %p119
      %p121 = pneg %p120
      // Predicated region
      $region21: #{tpu_custom_call.1} parent=5 // pred_check
        _
      $region22: #{tpu_custom_call.1} parent=5 // pred_check_branch
        %123 = sbr.rel (%p120) target = $region24
      $region23: #{tpu_custom_call.1} parent=5 // pred_region
        %s124 = ssub.s32 %s13, 1
        %s125 = sand.u32 %s40, 1
        %s126 = scalar_lea.sflag [#allocation3], %s125
        %s127 = sand.u32 %s40, 1
        %s128 = smul.addr %s127, 8
        %s129 = scalar_lea.vmem [#allocation2], %s128
        // Predicated region
        $region25: #{tpu_custom_call.1} parent=23 // pred_check
          %p130 = pneg %p53
        $region26: #{tpu_custom_call.1} parent=23 // pred_check_branch
          %132 = sbr.rel (%p130) target = $region28
        $region27: #{tpu_custom_call.1} parent=23 // pred_region
          %134 = dma.done %s126, 128
        $region28: #{tpu_custom_call.1} parent=23 // pred_fallthru
          _
        %s135 = sand.u32 %s40, 1
        %s136 = scalar_lea.sflag [#allocation3], %s135
        %s137 = sand.u32 %s40, 1
        %s138 = smul.addr %s137, 8
        %s139 = scalar_lea.vmem [#allocation2], %s138
        %p140 = pneg %p53
        %p141 = pneg %p50
        %p142 = pneg %p79
        %p143 = pneg %p76
        %s144 = sand.u32 %s66, 1
        %s145 = scalar_lea.sflag [#allocation4], %s144
        %s146 = sand.u32 %s66, 1
        %s147 = smul.addr %s146, 8
        %s148 = scalar_lea.vmem [#allocation5], %s147
        %s149 = sadd.s32 %s22, %s23
        %p150 = scmp.eq.s32.totalorder %s23, 0
        // Predicated region
        $region29: #{tpu_custom_call.1} parent=23 // pred_check
          %p151 = pneg %p150
        $region30: #{tpu_custom_call.1} parent=23 // pred_check_branch
          %153 = sbr.rel (%p151) target = $region32
        $region31: #{tpu_custom_call.1} parent=23 // pred_region
          %vm154 = vcmask 64512
          %155 = vst.msk [vmem:[%s148] sm:$0xff] %vm154, 0.0
        $region32: #{tpu_custom_call.1} parent=23 // pred_fallthru
          _
        %v156 = vld [vmem:[%s129] sm:$0xff]
        %v157 = vld [vmem:[%s148] sm:$0xff]
        %158 = vmatpush.xpose.msra.mxu0 0.0
        %159 = vmatpush.xpose.msra.mxu0 0.0
        %160 = vmatpush.xpose.msra.mxu0 0.0
        %161 = vmatpush.xpose.msra.mxu0 0.0
        %162 = vmatpush.xpose.msra.mxu0 0.0
        %163 = vmatpush.xpose.msra.mxu0 0.0
        %164 = vmatpush.xpose.msra.mxu0 0.0
        %165 = vmatpush.xpose.msra.mxu0 0.0
        %166 = vmatpush.xpose.msra.mxu0 0.0
        %167 = vmatpush.xpose.msra.mxu0 0.0
        %168 = vmatpush.xpose.msra.mxu0 0.0
        %169 = vmatpush.xpose.msra.mxu0 0.0
        %170 = vmatpush.xpose.msra.mxu0 0.0
        %171 = vmatpush.xpose.msra.mxu0 0.0
        %172 = vmatpush.xpose.msra.mxu0 0.0
        %173 = vmatpush.xpose.msra.mxu0 %v156
        %174 = vmatmul.f32.gmra.mxu0 %v156
        %v175 = vpop.f32.mrf.mxu0
        %v176 = vadd.f32 0.0, %v175
        %177 = vdwg.mxu0
        %v178 = vadd.f32 %v157, %v176
        %vm179 = vcmask 64512
        %180 = vst.msk [vmem:[%s148] sm:$0xff] %vm179, %v178
        %s181 = sand.u32 %s66, 1
        %s182 = scalar_lea.sflag [#allocation4], %s181
        %s183 = sand.u32 %s66, 1
        %s184 = smul.addr %s183, 8
        %s185 = scalar_lea.vmem [#allocation5], %s184
        // Predicated region
        $region33: #{tpu_custom_call.1} parent=23 // pred_check
          %p186 = pneg %p76
        $region34: #{tpu_custom_call.1} parent=23 // pred_check_branch
          %188 = sbr.rel (%p186) target = $region36
        $region35: #{tpu_custom_call.1} parent=23 // pred_region
          %190 = vsyncadd %s182, 0
          %s191 = smul.addr %s22, 8
          %s192 = scalar_lea.hbm %s1, %s191
          %s194 = sshll.u32 %s185, 4
          %s195 = int_to_ptr.vmem [resolvable:$true] %s194
          %s196 = sshll.u32 %s192, 4
          %s197 = int_to_ptr.hbm [resolvable:$true] %s196
          %199 = dma.vmem_to_hbm [thread:$0]  %s195, 128, %s197, %s182
        $region36: #{tpu_custom_call.1} parent=23 // pred_fallthru
          _
      $region24: #{tpu_custom_call.1} parent=5 // pred_fallthru
        _
      %p200 = scmp.le.s32.totalorder 2, %s13
      // Predicated region
      $region37: #{tpu_custom_call.1} parent=5 // pred_check
        %p201 = pneg %p200
      $region38: #{tpu_custom_call.1} parent=5 // pred_check_branch
        %203 = sbr.rel (%p201) target = $region40
      $region39: #{tpu_custom_call.1} parent=5 // pred_region
        %s204 = ssub.s32 %s13, 2
        // Predicated region
        $region41: #{tpu_custom_call.1} parent=39 // pred_check
          %p205 = pneg %p82
        $region42: #{tpu_custom_call.1} parent=39 // pred_check_branch
          %207 = sbr.rel (%p205) target = $region44
        $region43: #{tpu_custom_call.1} parent=39 // pred_region
          %s208 = sand.u32 %s67, 1
          %s209 = scalar_lea.sflag [#allocation4], %s208
          %s210 = sand.u32 %s67, 1
          %s211 = smul.addr %s210, 8
          %s212 = scalar_lea.vmem [#allocation5], %s211
          %214 = dma.done %s209, 128
        $region44: #{tpu_custom_call.1} parent=39 // pred_fallthru
          _
      $region40: #{tpu_custom_call.1} parent=5 // pred_fallthru
        _
    $region6: #{tpu_custom_call.1} parent=1 // loop_footer
      %s17 = sadd.s32 1, %s13
    $region7: #{tpu_custom_call.1} parent=1 // loop_footer_branch
      %12 = sbr.rel target = $region3
    $region8: #{tpu_custom_call.1} parent=1 // loop_exit
      _
    %215 = vsyncpa [#allocation3], 1
    %s216 = scalar_lea.sflag [#allocation3], 1
    %217 = vsyncpa %s216, 1
    %218 = vsyncpa [#allocation4], 1
    %s219 = scalar_lea.sflag [#allocation4], 1
    %220 = vsyncpa %s219, 1

</llo_original>
